<compile_context>
chip_gen: v6e
topology: v6e:2x2x1
jax: 0.10.0
libtpu: 0.0.40
codegen_flags: <defaults>
</compile_context>

<pallas_src>
import functools

import jax
import jax.numpy as jnp
from jax.experimental import pallas as pl
from jax.experimental.pallas import tpu as pltpu


def _round_up(x, m):
    return (x + m - 1) // m * m


def _sigmoid(x):
    # sigmoid(x) == 0.5*tanh(0.5*x) + 0.5 : a single EUP push instead of exp + reciprocal.
    return 0.5 * jnp.tanh(0.5 * x) + 0.5


def _fused_lstm_stack_kernel(x_ref, h_ref, c_ref, w_ref, b_ref,
                             h_out_ref, c_out_ref, run_ref,
                             *, hidden_p, kp):
    """One grid step == one LSTM layer for one batch tile.

    x_ref   : (bt, kp)        bf16 layer-0 input, zero-padded to kp (lane-aligned)
    h_ref   : (1, bt, Hp)     bf16 previous hidden of this layer (zero-padded to Hp)
    c_ref   : (1, bt, Hp)     f32  previous cell of this layer (zero-padded to Hp)
    w_ref   : (1, kp+Hp, 4Hp) bf16 fused, gate-padded weight [W_ih ; W_hh] (transposed)
    b_ref   : (1, 1, 4Hp)     f32  combined bias (b_ih + b_hh), gate-padded
    h_out/c_out : (1, bt, Hp) f32  new hidden / cell (pad lanes come out exactly 0)
    run_ref : (bt, kp+Hp)     bf16 VMEM scratch: [running layer input | this layer's h]
    """
    Hp = hidden_p
    layer = pl.program_id(1)

    # Seed the running input with the (padded) external input at layer 0 only.
    @pl.when(layer == 0)
    def _():
        run_ref[:, 0:kp] = x_ref[...]

    # Place this layer's previous hidden next to the running input (no concatenate,
    # no relayout: kp and Hp are multiples of 128).
    run_ref[:, kp:kp + Hp] = h_ref[0]

    # Single fused MXU matmul: [running_input | h] @ [W_ih ; W_hh] in bf16, f32 acc.
    gates = jnp.dot(run_ref[...], w_ref[0],
                    preferred_element_type=jnp.float32) + b_ref[0]

    # Lane-aligned gate slices (Hp is a multiple of 128).
    i_g = _sigmoid(gates[:, 0 * Hp:1 * Hp])
    f_g = _sigmoid(gates[:, 1 * Hp:2 * Hp])
    g_g = jnp.tanh(gates[:, 2 * Hp:3 * Hp])
    o_g = _sigmoid(gates[:, 3 * Hp:4 * Hp])

    c_new = f_g * c_ref[0] + i_g * g_g          # f32
    h_new = o_g * jnp.tanh(c_new)               # f32

    h_out_ref[0] = h_new
    c_out_ref[0] = c_new

    # Running input for the next layer (dropout p=0.0 == identity); stays in VMEM.
    # Any stale data in run_ref[:, Hp:kp] hits zero weight rows for layers >= 1,
    # so no re-zeroing is needed.
    run_ref[:, 0:Hp] = h_new.astype(jnp.bfloat16)


class MultiLayerRNNCellPallas:
    """JAX/Pallas port of MultiLayerRNNCell (module='LSTM', dropout=0.0)."""

    def __init__(self, num_layers, input_size, hidden_size, key, dropout=0.0,
                 batch_tile=None):
        assert dropout == 0.0  # TODO(synk): dropout p>0 not implemented (identity at 0)
        self.num_layers = num_layers
        self.input_size = input_size
        self.hidden_size = hidden_size
        self.batch_tile = batch_tile
        H = hidden_size

        # Lane-aligned padded sizes.
        self.Hp = _round_up(H, 128)                                # padded hidden
        self.kp = max(_round_up(input_size, 128), self.Hp)         # padded running input
        self.K = self.kp + self.Hp                                 # fused LHS width

        stdv = 1.0 / (H ** 0.5)
        w_list, b_list = [], []
        self.params_f32 = []   # original (transposed, unpadded) f32 params for reference
        for layer in range(num_layers):
            in_sz = input_size if layer == 0 else H
            key, k1, k2, k3, k4 = jax.random.split(key, 5)
            # PyTorch LSTMCell shapes: W_ih (4H, in), W_hh (4H, H), b_ih/b_hh (4H,).
            w_ih = jax.random.uniform(k1, (4 * H, in_sz), jnp.float32, -stdv, stdv)
            w_hh = jax.random.uniform(k2, (4 * H, H), jnp.float32, -stdv, stdv)
            b_ih = jax.random.uniform(k3, (4 * H,), jnp.float32, -stdv, stdv)
            b_hh = jax.random.uniform(k4, (4 * H,), jnp.float32, -stdv, stdv)
            b_sum = b_ih + b_hh
            self.params_f32.append((w_ih.T, w_hh.T, b_sum.reshape(1, 4 * H)))

            # Fused, gate-padded weight: rows [0:kp] take W_ih^T (zero-padded),
            # rows [kp:kp+Hp] take W_hh^T (zero-padded); each gate's H columns sit
            # at a lane-aligned offset g*Hp.
            w = jnp.zeros((self.K, 4 * self.Hp), jnp.float32)
            bias = jnp.zeros((1, 4 * self.Hp), jnp.float32)
            for g in range(4):
                w = w.at[:in_sz, g * self.Hp:g * self.Hp + H].set(
                    w_ih[g * H:(g + 1) * H, :].T)
                w = w.at[self.kp:self.kp + H, g * self.Hp:g * self.Hp + H].set(
                    w_hh[g * H:(g + 1) * H, :].T)
                bias = bias.at[0, g * self.Hp:g * self.Hp + H].set(
                    b_sum[g * H:(g + 1) * H])
            w_list.append(w)
            b_list.append(bias)

        self.w_stacked = jnp.stack(w_list).astype(jnp.bfloat16)   # (L, K, 4Hp) bf16
        self.b_stacked = jnp.stack(b_list)                        # (L, 1, 4Hp) f32

    def init_state(self, bs):
        z = jnp.zeros((bs, self.hidden_size), jnp.float32)
        return [(z, z) for _ in range(self.num_layers)]

    def _vmem_limit_bytes(self, bt):
        Hp, kp, K = self.Hp, self.kp, self.K
        w_blk = K * 4 * Hp * 2
        in_blk = bt * kp * 2 + bt * Hp * 2 + bt * Hp * 4 + 4 * Hp * 4
        out_blk = 2 * bt * Hp * 4
        scratch = bt * K * 2
        gate_tmp = 5 * bt * 4 * Hp * 4          # gate accumulator + activations
        limit = 2 * (w_blk + in_blk + out_blk) + scratch + gate_tmp + (4 << 20)
        # Clamp: >=16 MiB; <=96 MiB (v5e/v6e have 128 MiB physical; v7x configs that
        # exceed 64 MiB need the N-tiling TODO above).
        return int(min(max(limit, 16 << 20), 96 << 20))

    def __call__(self, input_, states):
        assert len(states) == self.num_layers
        L, H, Hp, kp, K = self.num_layers, self.hidden_size, self.Hp, self.kp, self.K
        B = input_.shape[0]
        bt = self.batch_tile if self.batch_tile is not None else B
        assert B % bt == 0 and bt % 8 == 0

        # Host-side padding / casts (wrapper layout plumbing, not compute hoisting).
        xpad = jnp.zeros((B, kp), jnp.bfloat16).at[:, :self.input_size].set(
            input_.astype(jnp.bfloat16))
        h_in = jnp.zeros((L, B, Hp), jnp.bfloat16)
        c_in = jnp.zeros((L, B, Hp), jnp.float32)
        for i, (h, c) in enumerate(states):
            h_in = h_in.at[i, :, :H].set(h.astype(jnp.bfloat16))
            c_in = c_in.at[i, :, :H].set(c)

        kernel = functools.partial(_fused_lstm_stack_kernel, hidden_p=Hp, kp=kp)

        bytes_accessed = (xpad.size * 2 + h_in.size * 2 + c_in.size * 4
                          + (B // bt) * self.w_stacked.size * 2
                          + (B // bt) * self.b_stacked.size * 4
                          + 2 * L * B * Hp * 4)

        grid_spec = pltpu.PrefetchScalarGridSpec(
            num_scalar_prefetch=0,
            grid=(B // bt, L),                                    # (batch tiles, layers)
            in_specs=[
                pl.BlockSpec((bt, kp), lambda b, l: (b, 0)),          # x (layer 0)
                pl.BlockSpec((1, bt, Hp), lambda b, l: (l, b, 0)),    # h_in (bf16)
                pl.BlockSpec((1, bt, Hp), lambda b, l: (l, b, 0)),    # c_in (f32)
                pl.BlockSpec((1, K, 4 * Hp), lambda b, l: (l, 0, 0)), # fused weights
                pl.BlockSpec((1, 1, 4 * Hp), lambda b, l: (l, 0, 0)), # combined bias
            ],
            out_specs=(
                pl.BlockSpec((1, bt, Hp), lambda b, l: (l, b, 0)),    # h_out
                pl.BlockSpec((1, bt, Hp), lambda b, l: (l, b, 0)),    # c_out
            ),
            scratch_shapes=[pltpu.VMEM((bt, K), jnp.bfloat16)],       # [run_in | h]
        )

        h_out, c_out = pl.pallas_call(
            kernel,
            out_shape=(jax.ShapeDtypeStruct((L, B, Hp), jnp.float32),
                       jax.ShapeDtypeStruct((L, B, Hp), jnp.float32)),
            grid_spec=grid_spec,
            compiler_params=pltpu.CompilerParams(
                # Batch tiles are independent (megacore); layers are sequential and
                # must stay the innermost axis for the scratch carry.
                dimension_semantics=("parallel", "arbitrary"),
                vmem_limit_bytes=self._vmem_limit_bytes(bt)),
            cost_estimate=pl.CostEstimate(
                flops=int(2 * L * B * K * 4 * Hp),
                transcendentals=int(5 * L * B * Hp),
                bytes_accessed=int(bytes_accessed)),
        )(xpad, h_in, c_in, self.w_stacked, self.b_stacked)

        # Slice the lane padding back off host-side.
        return [(h_out[i, :, :H], c_out[i, :, :H]) for i in range(L)]


def _reference_forward_f32(cell, x, states):
    """Pure-JAX f32 reference of the original PyTorch math (unpadded weights)."""
    H = cell.hidden_size
    inp = x
    out = []
    for i in range(cell.num_layers):
        w_ih_t, w_hh_t, b = cell.params_f32[i]
        h, c = states[i]
        gates = inp @ w_ih_t + h @ w_hh_t + b
        i_g = jax.nn.sigmoid(gates[:, 0 * H:1 * H])
        f_g = jax.nn.sigmoid(gates[:, 1 * H:2 * H])
        g_g = jnp.tanh(gates[:, 2 * H:3 * H])
        o_g = jax.nn.sigmoid(gates[:, 3 * H:4 * H])
        c_new = f_g * c + i_g * g_g
        h_new = o_g * jnp.tanh(c_new)
        out.append((h_new, c_new))
        inp = h_new
    return out


def _reference_forward_bf16(cell, x, states):
    """Pure-JAX reference mimicking the kernel's exact bf16/f32 padded path."""
    H, Hp, kp = cell.hidden_size, cell.Hp, cell.kp
    B = x.shape[0]
    run = jnp.zeros((B, cell.K), jnp.bfloat16)
    run = run.at[:, :cell.input_size].set(x.astype(jnp.bfloat16))
    out = []
    for i in range(cell.num_layers):
        h, c = states[i]
        h_pad = jnp.zeros((B, Hp), jnp.bfloat16).at[:, :H].set(h.astype(jnp.bfloat16))
        c_pad = jnp.zeros((B, Hp), jnp.float32).at[:, :H].set(c)
        run = run.at[:, kp:kp + Hp].set(h_pad)
        gates = jnp.dot(run, cell.w_stacked[i],
                        preferred_element_type=jnp.float32) + cell.b_stacked[i]
        i_g = _sigmoid(gates[:, 0 * Hp:1 * Hp])
        f_g = _sigmoid(gates[:, 1 * Hp:2 * Hp])
        g_g = jnp.tanh(gates[:, 2 * Hp:3 * Hp])
        o_g = _sigmoid(gates[:, 3 * Hp:4 * Hp])
        c_new = f_g * c_pad + i_g * g_g
        h_new = o_g * jnp.tanh(c_new)
        out.append((h_new[:, :H], c_new[:, :H]))
        run = run.at[:, :Hp].set(h_new.astype(jnp.bfloat16))
    return out


if __name__ == "__main__":
    num_layers = 2
    input_size = 16
    hidden_size = 32
    batch = 8

    key = jax.random.PRNGKey(0)
    key, kx, kh, kc = jax.random.split(key, 4)

    cell = MultiLayerRNNCellPallas(num_layers, input_size, hidden_size, key)

    x = jax.random.normal(kx, (batch, input_size), jnp.float32)
    # Nonzero initial states to exercise the recurrent path.
    states = [
        (jax.random.normal(jax.random.fold_in(kh, i),
                           (batch, hidden_size), jnp.float32),
         jax.random.normal(jax.random.fold_in(kc, i),
                           (batch, hidden_size), jnp.float32))
        for i in range(num_layers)
    ]

    out_states = cell(x, states)
    jax.block_until_ready(out_states)

    # Check 1: exact-path reference (bf16 matmul operands, f32 accumulation, padded).
    ref_bf16 = _reference_forward_bf16(cell, x, states)
    for (h_p, c_p), (h_r, c_r) in zip(out_states, ref_bf16):
        assert jnp.allclose(h_p, h_r, atol=5e-3, rtol=5e-3)
        assert jnp.allclose(c_p, c_r, atol=5e-3, rtol=5e-3)

    # Check 2: full-f32 PyTorch-math reference (looser: weights/inputs quantized to bf16).
    ref_f32 = _reference_forward_f32(cell, x, states)
    for (h_p, c_p), (h_r, c_r) in zip(out_states, ref_f32):
        assert jnp.allclose(h_p, h_r, atol=5e-2, rtol=5e-2)
        assert jnp.allclose(c_p, c_r, atol=5e-2, rtol=5e-2)

    print("KERNEL_OK")
</pallas_src>

<mosaic_0001>
module attributes {stable_mosaic.version = 11 : i64} {
  func.func @_fused_lstm_stack_kernel(%arg0: i32, %arg1: i32, %arg2: memref<8x128xbf16, #tpu.memory_space<vmem>>, %arg3: memref<1x8x128xbf16, #tpu.memory_space<vmem>>, %arg4: memref<1x8x128xf32, #tpu.memory_space<vmem>>, %arg5: memref<1x256x512xbf16, #tpu.memory_space<vmem>>, %arg6: memref<1x1x512xf32, #tpu.memory_space<vmem>>, %arg7: memref<1x8x128xf32, #tpu.memory_space<vmem>>, %arg8: memref<1x8x128xf32, #tpu.memory_space<vmem>>, %arg9: memref<8x256xbf16, #tpu.memory_space<vmem>>) attributes {dimension_semantics = [#tpu.dimension_semantics<parallel>, #tpu.dimension_semantics<arbitrary>], iteration_bounds = array<i64: 1, 2>, scalar_prefetch = 0 : i64, scratch_operands = 1 : i64, tpu.core_type = #tpu.core_type<tc>, window_params = [{transform_indices = @transform_0, window_bounds = array<i64: 8, 128>}, {transform_indices = @transform_1, window_bounds = array<i64: 1, 8, 128>}, {transform_indices = @transform_2, window_bounds = array<i64: 1, 8, 128>}, {transform_indices = @transform_3, window_bounds = array<i64: 1, 256, 512>}, {transform_indices = @transform_4, window_bounds = array<i64: 1, 1, 512>}, {transform_indices = @transform_5, window_bounds = array<i64: 1, 8, 128>}, {transform_indices = @transform_6, window_bounds = array<i64: 1, 8, 128>}]} {
    %c0_i32 = arith.constant 0 : i32
    %0 = arith.cmpi eq, %arg1, %c0_i32 : i32
    %1 = arith.extui %0 : i1 to i32
    %c0_i32_0 = arith.constant 0 : i32
    %2 = arith.cmpi ne, %1, %c0_i32_0 : i32
    scf.if %2 {
      %c0_32 = arith.constant 0 : index
      %c0_33 = arith.constant 0 : index
      %55 = vector.load %arg2[%c0_32, %c0_33] : memref<8x128xbf16, #tpu.memory_space<vmem>>, vector<8x128xbf16>
      %c0_34 = arith.constant 0 : index
      %c0_35 = arith.constant 0 : index
      %56 = vector.load %arg9[%c0_34, %c0_35] : memref<8x256xbf16, #tpu.memory_space<vmem>>, vector<8x128xbf16>
      tpu.vector_store %arg9[%c0_34, %c0_35], %55 {strides = array<i32>} : memref<8x256xbf16, #tpu.memory_space<vmem>>, vector<8x128xbf16>,
    } else {
    }
    %c0 = arith.constant 0 : index
    %c0_1 = arith.constant 0 : index
    %c0_2 = arith.constant 0 : index
    %3 = vector.load %arg3[%c0, %c0_1, %c0_2] : memref<1x8x128xbf16, #tpu.memory_space<vmem>>, vector<1x8x128xbf16>
    %4 = vector.shape_cast %3 : vector<1x8x128xbf16> to vector<8x128xbf16>
    %c0_3 = arith.constant 0 : index
    %c128 = arith.constant 128 : index
    %5 = vector.load %arg9[%c0_3, %c128] : memref<8x256xbf16, #tpu.memory_space<vmem>>, vector<8x128xbf16>
    tpu.vector_store %arg9[%c0_3, %c128], %4 {strides = array<i32>} : memref<8x256xbf16, #tpu.memory_space<vmem>>, vector<8x128xbf16>,
    %c0_4 = arith.constant 0 : index
    %c0_5 = arith.constant 0 : index
    %6 = vector.load %arg9[%c0_4, %c0_5] : memref<8x256xbf16, #tpu.memory_space<vmem>>, vector<8x256xbf16>
    %c0_6 = arith.constant 0 : index
    %c0_7 = arith.constant 0 : index
    %c0_8 = arith.constant 0 : index
    %7 = vector.load %arg5[%c0_6, %c0_7, %c0_8] : memref<1x256x512xbf16, #tpu.memory_space<vmem>>, vector<1x256x512xbf16>
    %8 = vector.shape_cast %7 : vector<1x256x512xbf16> to vector<256x512xbf16>
    %cst = arith.constant dense<0.000000e+00> : vector<8x512xf32>
    %9 = tpu.matmul %6, %8, %cst {dimension_numbers = #tpu.dot_dimension_numbers<[1], [0], [0], [1], [0, 0, 1, 1], [], []>} : vector<8x256xbf16>, vector<256x512xbf16>, vector<8x512xf32> -> vector<8x512xf32>
    %c0_9 = arith.constant 0 : index
    %c0_10 = arith.constant 0 : index
    %c0_11 = arith.constant 0 : index
    %10 = vector.load %arg6[%c0_9, %c0_10, %c0_11] : memref<1x1x512xf32, #tpu.memory_space<vmem>>, vector<1x1x512xf32>
    %11 = vector.shape_cast %10 : vector<1x1x512xf32> to vector<1x512xf32>
    %12 = vector.broadcast %11 : vector<1x512xf32> to vector<8x512xf32>
    %13 = arith.addf %9, %12 : vector<8x512xf32>
    %14 = vector.extract_strided_slice %13 {offsets = [0, 0], sizes = [8, 128], strides = [1, 1]} : vector<8x512xf32> to vector<8x128xf32>
    %cst_12 = arith.constant 5.000000e-01 : f32
    %15 = vector.broadcast %cst_12 : f32 to vector<8x128xf32>
    %16 = arith.mulf %15, %14 : vector<8x128xf32>
    %17 = math.tanh %16 : vector<8x128xf32>
    %cst_13 = arith.constant 5.000000e-01 : f32
    %18 = vector.broadcast %cst_13 : f32 to vector<8x128xf32>
    %19 = arith.mulf %18, %17 : vector<8x128xf32>
    %cst_14 = arith.constant 5.000000e-01 : f32
    %20 = vector.broadcast %cst_14 : f32 to vector<8x128xf32>
    %21 = arith.addf %19, %20 : vector<8x128xf32>
    %22 = vector.extract_strided_slice %13 {offsets = [0, 128], sizes = [8, 128], strides = [1, 1]} : vector<8x512xf32> to vector<8x128xf32>
    %cst_15 = arith.constant 5.000000e-01 : f32
    %23 = vector.broadcast %cst_15 : f32 to vector<8x128xf32>
    %24 = arith.mulf %23, %22 : vector<8x128xf32>
    %25 = math.tanh %24 : vector<8x128xf32>
    %cst_16 = arith.constant 5.000000e-01 : f32
    %26 = vector.broadcast %cst_16 : f32 to vector<8x128xf32>
    %27 = arith.mulf %26, %25 : vector<8x128xf32>
    %cst_17 = arith.constant 5.000000e-01 : f32
    %28 = vector.broadcast %cst_17 : f32 to vector<8x128xf32>
    %29 = arith.addf %27, %28 : vector<8x128xf32>
    %30 = vector.extract_strided_slice %13 {offsets = [0, 256], sizes = [8, 128], strides = [1, 1]} : vector<8x512xf32> to vector<8x128xf32>
    %31 = math.tanh %30 : vector<8x128xf32>
    %32 = vector.extract_strided_slice %13 {offsets = [0, 384], sizes = [8, 128], strides = [1, 1]} : vector<8x512xf32> to vector<8x128xf32>
    %cst_18 = arith.constant 5.000000e-01 : f32
    %33 = vector.broadcast %cst_18 : f32 to vector<8x128xf32>
    %34 = arith.mulf %33, %32 : vector<8x128xf32>
    %35 = math.tanh %34 : vector<8x128xf32>
    %cst_19 = arith.constant 5.000000e-01 : f32
    %36 = vector.broadcast %cst_19 : f32 to vector<8x128xf32>
    %37 = arith.mulf %36, %35 : vector<8x128xf32>
    %cst_20 = arith.constant 5.000000e-01 : f32
    %38 = vector.broadcast %cst_20 : f32 to vector<8x128xf32>
    %39 = arith.addf %37, %38 : vector<8x128xf32>
    %c0_21 = arith.constant 0 : index
    %c0_22 = arith.constant 0 : index
    %c0_23 = arith.constant 0 : index
    %40 = vector.load %arg4[%c0_21, %c0_22, %c0_23] : memref<1x8x128xf32, #tpu.memory_space<vmem>>, vector<1x8x128xf32>
    %41 = vector.shape_cast %40 : vector<1x8x128xf32> to vector<8x128xf32>
    %42 = arith.mulf %29, %41 : vector<8x128xf32>
    %43 = arith.mulf %21, %31 : vector<8x128xf32>
    %44 = arith.addf %42, %43 : vector<8x128xf32>
    %45 = math.tanh %44 : vector<8x128xf32>
    %46 = arith.mulf %39, %45 : vector<8x128xf32>
    %c0_24 = arith.constant 0 : index
    %c0_25 = arith.constant 0 : index
    %c0_26 = arith.constant 0 : index
    %47 = vector.load %arg7[%c0_24, %c0_25, %c0_26] : memref<1x8x128xf32, #tpu.memory_space<vmem>>, vector<1x8x128xf32>
    %48 = vector.shape_cast %47 : vector<1x8x128xf32> to vector<8x128xf32>
    %49 = vector.shape_cast %46 : vector<8x128xf32> to vector<1x8x128xf32>
    tpu.vector_store %arg7[%c0_24, %c0_25, %c0_26], %49 {strides = array<i32>} : memref<1x8x128xf32, #tpu.memory_space<vmem>>, vector<1x8x128xf32>,
    %c0_27 = arith.constant 0 : index
    %c0_28 = arith.constant 0 : index
    %c0_29 = arith.constant 0 : index
    %50 = vector.load %arg8[%c0_27, %c0_28, %c0_29] : memref<1x8x128xf32, #tpu.memory_space<vmem>>, vector<1x8x128xf32>
    %51 = vector.shape_cast %50 : vector<1x8x128xf32> to vector<8x128xf32>
    %52 = vector.shape_cast %44 : vector<8x128xf32> to vector<1x8x128xf32>
    tpu.vector_store %arg8[%c0_27, %c0_28, %c0_29], %52 {strides = array<i32>} : memref<1x8x128xf32, #tpu.memory_space<vmem>>, vector<1x8x128xf32>,
    %53 = arith.truncf %46 : vector<8x128xf32> to vector<8x128xbf16>
    %c0_30 = arith.constant 0 : index
    %c0_31 = arith.constant 0 : index
    %54 = vector.load %arg9[%c0_30, %c0_31] : memref<8x256xbf16, #tpu.memory_space<vmem>>, vector<8x128xbf16>
    tpu.vector_store %arg9[%c0_30, %c0_31], %53 {strides = array<i32>} : memref<8x256xbf16, #tpu.memory_space<vmem>>, vector<8x128xbf16>,
    return
  }
  func.func @transform_0(%arg0: i32, %arg1: i32) -> (i32, i32) {
    %c0_i32 = arith.constant 0 : i32
    %c0_i32_0 = arith.constant 0 : i32
    return %arg0, %c0_i32 : i32, i32
  }
  func.func @transform_1(%arg0: i32, %arg1: i32) -> (i32, i32, i32) {
    %c0_i32 = arith.constant 0 : i32
    %c0_i32_0 = arith.constant 0 : i32
    return %arg1, %arg0, %c0_i32 : i32, i32, i32
  }
  func.func @transform_2(%arg0: i32, %arg1: i32) -> (i32, i32, i32) {
    %c0_i32 = arith.constant 0 : i32
    %c0_i32_0 = arith.constant 0 : i32
    return %arg1, %arg0, %c0_i32 : i32, i32, i32
  }
  func.func @transform_3(%arg0: i32, %arg1: i32) -> (i32, i32, i32) {
    %c0_i32 = arith.constant 0 : i32
    %c0_i32_0 = arith.constant 0 : i32
    %c0_i32_1 = arith.constant 0 : i32
    return %arg1, %c0_i32, %c0_i32_0 : i32, i32, i32
  }
  func.func @transform_4(%arg0: i32, %arg1: i32) -> (i32, i32, i32) {
    %c0_i32 = arith.constant 0 : i32
    %c0_i32_0 = arith.constant 0 : i32
    %c0_i32_1 = arith.constant 0 : i32
    return %arg1, %c0_i32, %c0_i32_0 : i32, i32, i32
  }
  func.func @transform_5(%arg0: i32, %arg1: i32) -> (i32, i32, i32) {
    %c0_i32 = arith.constant 0 : i32
    %c0_i32_0 = arith.constant 0 : i32
    return %arg1, %arg0, %c0_i32 : i32, i32, i32
  }
  func.func @transform_6(%arg0: i32, %arg1: i32) -> (i32, i32, i32) {
    %c0_i32 = arith.constant 0 : i32
    %c0_i32_0 = arith.constant 0 : i32
    return %arg1, %arg0, %c0_i32 : i32, i32, i32
  }
}

</mosaic_0001>

<llo_original>
// kernel: tpu_custom_call.1
$region0: #{tpu_custom_call.1}
  #allocation0 [shape = 'u32[]', space=smem, size = 0x4, offset = 0x4, fixed_abs, tag = 'smem constant byte address 0x4 - core index']
  #allocation1 [shape = 'u32[144,128]{1,0:T(1,128)}', space=vmem, size = 0x12000, scoped, tag = 'internal scratch']
  #allocation2 [shape = 'bf16[8,256]{1,0:T(8,128)(2,1)}', space=vmem, size = 0x1000, scoped, tag = 'scratch operand']
  %s0 = inlined_call_operand.hbm [shape: bf16[8,128], index: 0, kind: input, shape index: {}]
  %s1 = inlined_call_operand.hbm [shape: bf16[2,8,128], index: 1, kind: input, shape index: {}]
  %s2 = inlined_call_operand.hbm [shape: f32[2,8,128], index: 2, kind: input, shape index: {}]
  %s3 = inlined_call_operand.hbm [shape: bf16[2,256,512], index: 3, kind: input, shape index: {}]
  %s4 = inlined_call_operand.hbm [shape: f32[2,1,512], index: 4, kind: input, shape index: {}]
  %s5 = inlined_call_operand.hbm [shape: f32[2,8,128], index: 5, kind: output, shape index: {0}]
  %s6 = inlined_call_operand.hbm [shape: f32[2,8,128], index: 6, kind: output, shape index: {1}]
  %7 = xla_tuple %s5, %s6
  %s8 = sld [smem:[#allocation0]]
  $region85: #{tpu_custom_call.1} parent=0
    _
  %s10 = ssub.s32 1, %s8
  %s11 = scalar_select 0, %s10, %s8
  $region1: #{tpu_custom_call.1} parent=0
    #allocation3 [shape = 'u8[2048]{0}', space=vmem, size = 0x800, scoped, tag = 'input window, operand 0, single buffered']
    #allocation4 [shape = 's32[2]{0}', space=sflag, size = 0x8, scoped, tag = 'scoped memory for tpu_custom_call.1']
    #allocation5 [shape = 's32[2]{0}', space=sflag, size = 0x8, scoped, tag = 'scoped memory for tpu_custom_call.1']
    #allocation6 [shape = 'u8[4096]{0}', space=vmem, size = 0x1000, scoped, tag = 'input window, operand 1']
    #allocation7 [shape = 's32[2]{0}', space=sflag, size = 0x8, scoped, tag = 'scoped memory for tpu_custom_call.1']
    #allocation8 [shape = 'u8[8192]{0}', space=vmem, size = 0x2000, scoped, tag = 'input window, operand 2']
    #allocation9 [shape = 'u8[524288]{0}', space=vmem, size = 0x80000, scoped, tag = 'input window, operand 3']
    #allocation10 [shape = 's32[2]{0}', space=sflag, size = 0x8, scoped, tag = 'scoped memory for tpu_custom_call.1']
    #allocation11 [shape = 'u8[4096]{0}', space=vmem, size = 0x1000, scoped, tag = 'input window, operand 4']
    #allocation12 [shape = 'u8[8192]{0}', space=vmem, size = 0x2000, scoped, tag = 'output window, operand 0']
    #allocation13 [shape = 'u8[8192]{0}', space=vmem, size = 0x2000, scoped, tag = 'output window, operand 1']
    #allocation14 [shape = 's32[2]{0}', space=sflag, size = 0x8, scoped, tag = 'scoped memory for tpu_custom_call.1']
    %12 = vsyncpa [#allocation4], 0
    %13 = vsyncpa [#allocation7], 0
    %s14 = scalar_lea.sflag [#allocation7], 1
    %15 = vsyncpa %s14, 0
    %16 = vsyncpa [#allocation10], 0
    %s17 = scalar_lea.sflag [#allocation10], 1
    %18 = vsyncpa %s17, 0
    %19 = vsyncpa [#allocation5], 0
    %s20 = scalar_lea.sflag [#allocation5], 1
    %21 = vsyncpa %s20, 0
    %22 = vsyncpa [#allocation14], 0
    %s23 = scalar_lea.sflag [#allocation14], 1
    %24 = vsyncpa %s23, 0
    loop: start=0, step=1, limit=4
    $region2: #{tpu_custom_call.1} parent=1 // loop_pre_header
      _
    $region3: #{tpu_custom_call.1} parent=1 // loop_header
      %s26 = sphi 0, %s30
      %p27 = scmp.ge.s32.totalorder %s26, 4
      %s33 = sphi 0, %s45
      %s34 = sphi 0, %s41
      %s35 = sphi 0, %s33
      %s36 = sphi 0, %s34
      %s37 = sphi 0, %s35
      %s38 = sphi 0, %s36
      %s48 = sphi 0, %s50
      %s51 = sphi 0, %s48
      %s52 = sphi 0, %s51
      %s68 = sphi 0, %s52
      %s76 = sphi 0, %s78
      %s79 = sphi 0, %s76
      %s80 = sphi 0, %s79
      %s96 = sphi 0, %s80
      %s104 = sphi 0, %s106
      %s107 = sphi 0, %s104
      %s108 = sphi 0, %s107
      %s124 = sphi 0, %s108
      %s130 = sphi 0, %s132
      %s133 = sphi 0, %s130
      %s134 = sphi 0, %s133
      %s150 = sphi 0, %s134
      %s156 = sphi 0, %s158
      %s159 = sphi 0, %s156
      %s160 = sphi 0, %s159
      %s176 = sphi 0, %s160
      %s184 = sphi 0, %s186
      %s187 = sphi 0, %s184
      %s188 = sphi 0, %s187
      %s204 = sphi 0, %s188
      %s212 = sphi 0, %s214
      %s215 = sphi 0, %s212
      %s216 = sphi 0, %s215
      %s232 = sphi 0, %s216
    $region4: #{tpu_custom_call.1} parent=1 // loop_header_branch
      %29 = sbr.rel (%p27) target = $region8
    $region5: #{tpu_custom_call.1} parent=1 // loop_body
      %s31 = ssub.s32 %s26, 1
      %s32 = ssub.s32 %s26, 2
      %s39 = sadd.s32 1, %s34
      %p40 = scmp.ge.s32.totalorder %s39, 2
      %s41 = scalar_select %p40, 0, %s39
      %s42 = sadd.s32 1, %s33
      %s43 = scalar_select %p40, %s42, %s33
      %p44 = scmp.ge.s32.totalorder %s43, 1
      %s45 = scalar_select %p44, 0, %s43
      %s46 = ssub.s32 %s33, %s45
      %p47 = scmp.eq.s32.totalorder %s46, 0
      %s49 = sadd.s32 %s48, 1
      %s50 = scalar_select %p47, %s48, %s49
      %p53 = pneg %p47
      %p54 = scmp.eq.s32.totalorder %s26, 1
      %p55 = por %p53, %p54
      %p56 = scmp.ne.s32.totalorder %s48, %s51
      %p57 = scmp.eq.s32.totalorder %s26, 0
      %p58 = por %p56, %p57
      %p59 = scmp.ne.s32.totalorder %s48, %s51
      %p60 = scmp.eq.s32.totalorder %s31, 1
      %p61 = por %p59, %p60
      %p62 = scmp.ne.s32.totalorder %s51, %s52
      %p63 = scmp.eq.s32.totalorder %s31, 0
      %p64 = por %p62, %p63
      %p65 = scmp.ne.s32.totalorder %s51, %s52
      %p66 = scmp.eq.s32.totalorder %s32, 1
      %p67 = por %p65, %p66
      %p69 = scmp.ne.s32.totalorder %s52, %s68
      %p70 = scmp.eq.s32.totalorder %s32, 0
      %p71 = por %p69, %p70
      %s72 = ssub.s32 %s34, %s41
      %s73 = ssub.s32 %s33, %s45
      %s74 = sor.u32 %s72, %s73
      %p75 = scmp.eq.s32.totalorder %s74, 0
      %s77 = sadd.s32 %s76, 1
      %s78 = scalar_select %p75, %s76, %s77
      %p81 = pneg %p75
      %p82 = scmp.eq.s32.totalorder %s26, 1
      %p83 = por %p81, %p82
      %p84 = scmp.ne.s32.totalorder %s76, %s79
      %p85 = scmp.eq.s32.totalorder %s26, 0
      %p86 = por %p84, %p85
      %p87 = scmp.ne.s32.totalorder %s76, %s79
      %p88 = scmp.eq.s32.totalorder %s31, 1
      %p89 = por %p87, %p88
      %p90 = scmp.ne.s32.totalorder %s79, %s80
      %p91 = scmp.eq.s32.totalorder %s31, 0
      %p92 = por %p90, %p91
      %p93 = scmp.ne.s32.totalorder %s79, %s80
      %p94 = scmp.eq.s32.totalorder %s32, 1
      %p95 = por %p93, %p94
      %p97 = scmp.ne.s32.totalorder %s80, %s96
      %p98 = scmp.eq.s32.totalorder %s32, 0
      %p99 = por %p97, %p98
      %s100 = ssub.s32 %s34, %s41
      %s101 = ssub.s32 %s33, %s45
      %s102 = sor.u32 %s100, %s101
      %p103 = scmp.eq.s32.totalorder %s102, 0
      %s105 = sadd.s32 %s104, 1
      %s106 = scalar_select %p103, %s104, %s105
      %p109 = pneg %p103
      %p110 = scmp.eq.s32.totalorder %s26, 1
      %p111 = por %p109, %p110
      %p112 = scmp.ne.s32.totalorder %s104, %s107
      %p113 = scmp.eq.s32.totalorder %s26, 0
      %p114 = por %p112, %p113
      %p115 = scmp.ne.s32.totalorder %s104, %s107
      %p116 = scmp.eq.s32.totalorder %s31, 1
      %p117 = por %p115, %p116
      %p118 = scmp.ne.s32.totalorder %s107, %s108
      %p119 = scmp.eq.s32.totalorder %s31, 0
      %p120 = por %p118, %p119
      %p121 = scmp.ne.s32.totalorder %s107, %s108
      %p122 = scmp.eq.s32.totalorder %s32, 1
      %p123 = por %p121, %p122
      %p125 = scmp.ne.s32.totalorder %s108, %s124
      %p126 = scmp.eq.s32.totalorder %s32, 0
      %p127 = por %p125, %p126
      %s128 = ssub.s32 %s34, %s41
      %p129 = scmp.eq.s32.totalorder %s128, 0
      %s131 = sadd.s32 %s130, 1
      %s132 = scalar_select %p129, %s130, %s131
      %p135 = pneg %p129
      %p136 = scmp.eq.s32.totalorder %s26, 1
      %p137 = por %p135, %p136
      %p138 = scmp.ne.s32.totalorder %s130, %s133
      %p139 = scmp.eq.s32.totalorder %s26, 0
      %p140 = por %p138, %p139
      %p141 = scmp.ne.s32.totalorder %s130, %s133
      %p142 = scmp.eq.s32.totalorder %s31, 1
      %p143 = por %p141, %p142
      %p144 = scmp.ne.s32.totalorder %s133, %s134
      %p145 = scmp.eq.s32.totalorder %s31, 0
      %p146 = por %p144, %p145
      %p147 = scmp.ne.s32.totalorder %s133, %s134
      %p148 = scmp.eq.s32.totalorder %s32, 1
      %p149 = por %p147, %p148
      %p151 = scmp.ne.s32.totalorder %s134, %s150
      %p152 = scmp.eq.s32.totalorder %s32, 0
      %p153 = por %p151, %p152
      %s154 = ssub.s32 %s34, %s41
      %p155 = scmp.eq.s32.totalorder %s154, 0
      %s157 = sadd.s32 %s156, 1
      %s158 = scalar_select %p155, %s156, %s157
      %p161 = pneg %p155
      %p162 = scmp.eq.s32.totalorder %s26, 1
      %p163 = por %p161, %p162
      %p164 = scmp.ne.s32.totalorder %s156, %s159
      %p165 = scmp.eq.s32.totalorder %s26, 0
      %p166 = por %p164, %p165
      %p167 = scmp.ne.s32.totalorder %s156, %s159
      %p168 = scmp.eq.s32.totalorder %s31, 1
      %p169 = por %p167, %p168
      %p170 = scmp.ne.s32.totalorder %s159, %s160
      %p171 = scmp.eq.s32.totalorder %s31, 0
      %p172 = por %p170, %p171
      %p173 = scmp.ne.s32.totalorder %s159, %s160
      %p174 = scmp.eq.s32.totalorder %s32, 1
      %p175 = por %p173, %p174
      %p177 = scmp.ne.s32.totalorder %s160, %s176
      %p178 = scmp.eq.s32.totalorder %s32, 0
      %p179 = por %p177, %p178
      %s180 = ssub.s32 %s34, %s41
      %s181 = ssub.s32 %s33, %s45
      %s182 = sor.u32 %s180, %s181
      %p183 = scmp.eq.s32.totalorder %s182, 0
      %s185 = sadd.s32 %s184, 1
      %s186 = scalar_select %p183, %s184, %s185
      %p189 = pneg %p183
      %p190 = scmp.eq.s32.totalorder %s26, 1
      %p191 = por %p189, %p190
      %p192 = scmp.ne.s32.totalorder %s184, %s187
      %p193 = scmp.eq.s32.totalorder %s26, 0
      %p194 = por %p192, %p193
      %p195 = scmp.ne.s32.totalorder %s184, %s187
      %p196 = scmp.eq.s32.totalorder %s31, 1
      %p197 = por %p195, %p196
      %p198 = scmp.ne.s32.totalorder %s187, %s188
      %p199 = scmp.eq.s32.totalorder %s31, 0
      %p200 = por %p198, %p199
      %p201 = scmp.ne.s32.totalorder %s187, %s188
      %p202 = scmp.eq.s32.totalorder %s32, 1
      %p203 = por %p201, %p202
      %p205 = scmp.ne.s32.totalorder %s188, %s204
      %p206 = scmp.eq.s32.totalorder %s32, 0
      %p207 = por %p205, %p206
      %s208 = ssub.s32 %s34, %s41
      %s209 = ssub.s32 %s33, %s45
      %s210 = sor.u32 %s208, %s209
      %p211 = scmp.eq.s32.totalorder %s210, 0
      %s213 = sadd.s32 %s212, 1
      %s214 = scalar_select %p211, %s212, %s213
      %p217 = pneg %p211
      %p218 = scmp.eq.s32.totalorder %s26, 1
      %p219 = por %p217, %p218
      %p220 = scmp.ne.s32.totalorder %s212, %s215
      %p221 = scmp.eq.s32.totalorder %s26, 0
      %p222 = por %p220, %p221
      %p223 = scmp.ne.s32.totalorder %s212, %s215
      %p224 = scmp.eq.s32.totalorder %s31, 1
      %p225 = por %p223, %p224
      %p226 = scmp.ne.s32.totalorder %s215, %s216
      %p227 = scmp.eq.s32.totalorder %s31, 0
      %p228 = por %p226, %p227
      %p229 = scmp.ne.s32.totalorder %s215, %s216
      %p230 = scmp.eq.s32.totalorder %s32, 1
      %p231 = por %p229, %p230
      %p233 = scmp.ne.s32.totalorder %s216, %s232
      %p234 = scmp.eq.s32.totalorder %s32, 0
      %p235 = por %p233, %p234
      %p236 = scmp.le.s32.totalorder 1, %s26
      %p237 = scmp.lt.s32.totalorder %s26, 3
      %p238 = pnand %p236, %p237
      %p239 = pneg %p238
      // Predicated region
      $region9: #{tpu_custom_call.1} parent=5 // pred_check
        _
      $region10: #{tpu_custom_call.1} parent=5 // pred_check_branch
        %241 = sbr.rel (%p238) target = $region12
      $region11: #{tpu_custom_call.1} parent=5 // pred_region
        %s242 = ssub.s32 %s26, 1
        // Predicated region
        $region13: #{tpu_custom_call.1} parent=11 // pred_check
          %p243 = pneg %p64
        $region14: #{tpu_custom_call.1} parent=11 // pred_check_branch
          %245 = sbr.rel (%p243) target = $region16
        $region15: #{tpu_custom_call.1} parent=11 // pred_region
          %s247 = ssub.s32 64, 64
          %248 = vsyncadd [#allocation4], %s247
          %s249 = smul.addr %s35, 64
          %s250 = scalar_lea.hbm %s0, %s249
          %s252 = sshll.u32 [#allocation3], 4
          %s253 = int_to_ptr.vmem [resolvable:$true] %s252
          %255 = dma.hbm_to_vmem [thread:$0]  %s250, 64, %s253, [#allocation4]
        $region16: #{tpu_custom_call.1} parent=11 // pred_fallthru
          _
      $region12: #{tpu_custom_call.1} parent=5 // pred_fallthru
        _
      %p256 = scmp.lt.s32.totalorder %s26, 2
      // Predicated region
      $region17: #{tpu_custom_call.1} parent=5 // pred_check
        %p257 = pneg %p256
      $region18: #{tpu_custom_call.1} parent=5 // pred_check_branch
        %259 = sbr.rel (%p257) target = $region20
      $region19: #{tpu_custom_call.1} parent=5 // pred_region
        // Predicated region
        $region21: #{tpu_custom_call.1} parent=19 // pred_check
          %p260 = pneg %p86
        $region22: #{tpu_custom_call.1} parent=19 // pred_check_branch
          %262 = sbr.rel (%p260) target = $region24
        $region23: #{tpu_custom_call.1} parent=19 // pred_region
          %s263 = sand.u32 %s26, 1
          %s264 = scalar_lea.sflag [#allocation7], %s263
          %s265 = sand.u32 %s76, 1
          %s266 = smul.addr %s265, 4
          %s267 = scalar_lea.vmem [#allocation6], %s266
          %s269 = ssub.s32 64, 64
          %270 = vsyncadd %s264, %s269
          %s271 = sadd.s32 %s33, %s34
          %s272 = smul.addr %s271, 64
          %s273 = scalar_lea.hbm %s1, %s272
          %s275 = sshll.u32 %s267, 4
          %s276 = int_to_ptr.vmem [resolvable:$true] %s275
          %278 = dma.hbm_to_vmem [thread:$0]  %s273, 64, %s276, %s264
        $region24: #{tpu_custom_call.1} parent=19 // pred_fallthru
          _
        // Predicated region
        $region25: #{tpu_custom_call.1} parent=19 // pred_check
          %p279 = pneg %p114
        $region26: #{tpu_custom_call.1} parent=19 // pred_check_branch
          %281 = sbr.rel (%p279) target = $region28
        $region27: #{tpu_custom_call.1} parent=19 // pred_region
          %s282 = sand.u32 %s26, 1
          %s283 = scalar_lea.sflag [#allocation7], %s282
          %s284 = sand.u32 %s104, 1
          %s285 = smul.addr %s284, 8
          %s286 = scalar_lea.vmem [#allocation8], %s285
          %s288 = ssub.s32 128, 128
          %289 = vsyncadd %s283, %s288
          %s290 = sadd.s32 %s33, %s34
          %s291 = smul.addr %s290, 128
          %s292 = scalar_lea.hbm %s2, %s291
          %s294 = sshll.u32 %s286, 4
          %s295 = int_to_ptr.vmem [resolvable:$true] %s294
          %297 = dma.hbm_to_vmem [thread:$0]  %s292, 128, %s295, %s283
        $region28: #{tpu_custom_call.1} parent=19 // pred_fallthru
          _
        // Predicated region
        $region29: #{tpu_custom_call.1} parent=19 // pred_check
          %p298 = pneg %p140
        $region30: #{tpu_custom_call.1} parent=19 // pred_check_branch
          %300 = sbr.rel (%p298) target = $region32
        $region31: #{tpu_custom_call.1} parent=19 // pred_region
          %s301 = sand.u32 %s26, 1
          %s302 = scalar_lea.sflag [#allocation10], %s301
          %s303 = sand.u32 %s130, 1
          %s304 = smul.addr %s303, 512
          %s305 = scalar_lea.vmem [#allocation9], %s304
          %s307 = ssub.s32 8192, 8192
          %308 = vsyncadd %s302, %s307
          %s309 = smul.addr %s34, 128
          %s310 = smul.addr %s309, 64
          %s311 = scalar_lea.hbm %s3, %s310
          %s312 = sshll.u32 %s305, 4
          %s313 = int_to_ptr.vmem [resolvable:$true] %s312
          %318 = dma.hbm_to_vmem [thread:$0]  %s311, 8192, %s313, %s302, 256, 256, 16
        $region32: #{tpu_custom_call.1} parent=19 // pred_fallthru
          _
        // Predicated region
        $region33: #{tpu_custom_call.1} parent=19 // pred_check
          %p319 = pneg %p166
        $region34: #{tpu_custom_call.1} parent=19 // pred_check_branch
          %321 = sbr.rel (%p319) target = $region36
        $region35: #{tpu_custom_call.1} parent=19 // pred_region
          %s322 = sand.u32 %s26, 1
          %s323 = scalar_lea.sflag [#allocation10], %s322
          %s324 = sand.u32 %s156, 1
          %s325 = smul.addr %s324, 4
          %s326 = scalar_lea.vmem [#allocation11], %s325
          %s328 = ssub.s32 64, 64
          %329 = vsyncadd %s323, %s328
          %s330 = smul.addr %s34, 4
          %s331 = smul.addr %s330, 16
          %s332 = scalar_lea.hbm %s4, %s331
          %s334 = sshll.u32 %s326, 4
          %s335 = int_to_ptr.vmem [resolvable:$true] %s334
          %337 = dma.hbm_to_vmem [thread:$0]  %s332, 64, %s335, %s323
        $region36: #{tpu_custom_call.1} parent=19 // pred_fallthru
          _
      $region20: #{tpu_custom_call.1} parent=5 // pred_fallthru
        _
      %p338 = scmp.le.s32.totalorder 1, %s26
      %p339 = scmp.lt.s32.totalorder %s26, 3
      %p340 = pnand %p338, %p339
      %p341 = pneg %p340
      // Predicated region
      $region37: #{tpu_custom_call.1} parent=5 // pred_check
        _
      $region38: #{tpu_custom_call.1} parent=5 // pred_check_branch
        %343 = sbr.rel (%p340) target = $region40
      $region39: #{tpu_custom_call.1} parent=5 // pred_region
        %s344 = ssub.s32 %s26, 1
        // Predicated region
        $region41: #{tpu_custom_call.1} parent=39 // pred_check
          %p345 = pneg %p64
        $region42: #{tpu_custom_call.1} parent=39 // pred_check_branch
          %347 = sbr.rel (%p345) target = $region44
        $region43: #{tpu_custom_call.1} parent=39 // pred_region
          %348 = dma.done [#allocation4], 64
        $region44: #{tpu_custom_call.1} parent=39 // pred_fallthru
          _
        %s349 = sand.u32 %s31, 1
        %s350 = scalar_lea.sflag [#allocation7], %s349
        %s351 = sand.u32 %s79, 1
        %s352 = smul.addr %s351, 4
        %s353 = scalar_lea.vmem [#allocation6], %s352
        // Predicated region
        $region45: #{tpu_custom_call.1} parent=39 // pred_check
          %p354 = pneg %p92
        $region46: #{tpu_custom_call.1} parent=39 // pred_check_branch
          %356 = sbr.rel (%p354) target = $region48
        $region47: #{tpu_custom_call.1} parent=39 // pred_region
          %357 = dma.done %s350, 64
        $region48: #{tpu_custom_call.1} parent=39 // pred_fallthru
          _
        %s358 = sand.u32 %s31, 1
        %s359 = scalar_lea.sflag [#allocation7], %s358
        %s360 = sand.u32 %s107, 1
        %s361 = smul.addr %s360, 8
        %s362 = scalar_lea.vmem [#allocation8], %s361
        // Predicated region
        $region49: #{tpu_custom_call.1} parent=39 // pred_check
          %p363 = pneg %p120
        $region50: #{tpu_custom_call.1} parent=39 // pred_check_branch
          %365 = sbr.rel (%p363) target = $region52
        $region51: #{tpu_custom_call.1} parent=39 // pred_region
          %366 = dma.done %s359, 128
        $region52: #{tpu_custom_call.1} parent=39 // pred_fallthru
          _
        %s367 = sand.u32 %s31, 1
        %s368 = scalar_lea.sflag [#allocation10], %s367
        %s369 = sand.u32 %s133, 1
        %s370 = smul.addr %s369, 512
        %s371 = scalar_lea.vmem [#allocation9], %s370
        // Predicated region
        $region53: #{tpu_custom_call.1} parent=39 // pred_check
          %p372 = pneg %p146
        $region54: #{tpu_custom_call.1} parent=39 // pred_check_branch
          %374 = sbr.rel (%p372) target = $region56
        $region55: #{tpu_custom_call.1} parent=39 // pred_region
          %375 = dma.done %s368, 8192
        $region56: #{tpu_custom_call.1} parent=39 // pred_fallthru
          _
        %s376 = sand.u32 %s31, 1
        %s377 = scalar_lea.sflag [#allocation10], %s376
        %s378 = sand.u32 %s159, 1
        %s379 = smul.addr %s378, 4
        %s380 = scalar_lea.vmem [#allocation11], %s379
        // Predicated region
        $region57: #{tpu_custom_call.1} parent=39 // pred_check
          %p381 = pneg %p172
        $region58: #{tpu_custom_call.1} parent=39 // pred_check_branch
          %383 = sbr.rel (%p381) target = $region60
        $region59: #{tpu_custom_call.1} parent=39 // pred_region
          %384 = dma.done %s377, 64
        $region60: #{tpu_custom_call.1} parent=39 // pred_fallthru
          _
        %p385 = pneg %p64
        %p386 = pneg %p61
        %s387 = sand.u32 %s31, 1
        %s388 = scalar_lea.sflag [#allocation7], %s387
        %s389 = sand.u32 %s79, 1
        %s390 = smul.addr %s389, 4
        %s391 = scalar_lea.vmem [#allocation6], %s390
        %p392 = pneg %p92
        %p393 = pneg %p89
        %s394 = sand.u32 %s31, 1
        %s395 = scalar_lea.sflag [#allocation7], %s394
        %s396 = sand.u32 %s107, 1
        %s397 = smul.addr %s396, 8
        %s398 = scalar_lea.vmem [#allocation8], %s397
        %p399 = pneg %p120
        %p400 = pneg %p117
        %s401 = sand.u32 %s31, 1
        %s402 = scalar_lea.sflag [#allocation10], %s401
        %s403 = sand.u32 %s133, 1
        %s404 = smul.addr %s403, 512
        %s405 = scalar_lea.vmem [#allocation9], %s404
        %p406 = pneg %p146
        %p407 = pneg %p143
        %s408 = sand.u32 %s31, 1
        %s409 = scalar_lea.sflag [#allocation10], %s408
        %s410 = sand.u32 %s159, 1
        %s411 = smul.addr %s410, 4
        %s412 = scalar_lea.vmem [#allocation11], %s411
        %p413 = pneg %p172
        %p414 = pneg %p169
        %p415 = pneg %p200
        %p416 = pneg %p197
        %s417 = sand.u32 %s187, 1
        %s418 = scalar_lea.sflag [#allocation5], %s417
        %s419 = sand.u32 %s187, 1
        %s420 = smul.addr %s419, 8
        %s421 = scalar_lea.vmem [#allocation12], %s420
        %p422 = pneg %p228
        %p423 = pneg %p225
        %s424 = sand.u32 %s215, 1
        %s425 = scalar_lea.sflag [#allocation14], %s424
        %s426 = sand.u32 %s215, 1
        %s427 = smul.addr %s426, 8
        %s428 = scalar_lea.vmem [#allocation13], %s427
        %p429 = scmp.eq.s32.totalorder %s36, 0
        // Predicated region
        $region61: #{tpu_custom_call.1} parent=39 // pred_check
          %p430 = pneg %p429
        $region62: #{tpu_custom_call.1} parent=39 // pred_check_branch
          %432 = sbr.rel (%p430) target = $region64
        $region63: #{tpu_custom_call.1} parent=39 // pred_region
          %v433 = vld [vmem:[#allocation3] sm:$0xf]
          %434 = vst [vmem:[#allocation2] sm:$0xf] %v433
        $region64: #{tpu_custom_call.1} parent=39 // pred_fallthru
          _
        %v435 = vld [vmem:[%s353] sm:$0xf]
        %436 = vst [vmem:[#allocation2 + $0x4] sm:$0xf] %v435
        %v437 = vld [vmem:[#allocation2] sm:$0xff]
        %v438 = vld [vmem:[%s371] sm:$0xff]
        %v439 = vld [vmem:[%s371 + $0x8] sm:$0xff]
        %v440 = vld [vmem:[%s371 + $0x10] sm:$0xff]
        %v441 = vld [vmem:[%s371 + $0x18] sm:$0xff]
        %v442 = vld [vmem:[%s371 + $0x20] sm:$0xff]
        %v443 = vld [vmem:[%s371 + $0x28] sm:$0xff]
        %v444 = vld [vmem:[%s371 + $0x30] sm:$0xff]
        %v445 = vld [vmem:[%s371 + $0x38] sm:$0xff]
        %v446 = vld [vmem:[%s371 + $0x40] sm:$0xff]
        %v447 = vld [vmem:[%s371 + $0x48] sm:$0xff]
        %v448 = vld [vmem:[%s371 + $0x50] sm:$0xff]
        %v449 = vld [vmem:[%s371 + $0x58] sm:$0xff]
        %v450 = vld [vmem:[%s371 + $0x60] sm:$0xff]
        %v451 = vld [vmem:[%s371 + $0x68] sm:$0xff]
        %v452 = vld [vmem:[%s371 + $0x70] sm:$0xff]
        %v453 = vld [vmem:[%s371 + $0x78] sm:$0xff]
        %v454 = vld [vmem:[%s371 + $0x80] sm:$0xff]
        %v455 = vld [vmem:[%s371 + $0x88] sm:$0xff]
        %v456 = vld [vmem:[%s371 + $0x90] sm:$0xff]
        %v457 = vld [vmem:[%s371 + $0x98] sm:$0xff]
        %v458 = vld [vmem:[%s371 + $0xa0] sm:$0xff]
        %v459 = vld [vmem:[%s371 + $0xa8] sm:$0xff]
        %v460 = vld [vmem:[%s371 + $0xb0] sm:$0xff]
        %v461 = vld [vmem:[%s371 + $0xb8] sm:$0xff]
        %v462 = vld [vmem:[%s371 + $0xc0] sm:$0xff]
        %v463 = vld [vmem:[%s371 + $0xc8] sm:$0xff]
        %v464 = vld [vmem:[%s371 + $0xd0] sm:$0xff]
        %v465 = vld [vmem:[%s371 + $0xd8] sm:$0xff]
        %v466 = vld [vmem:[%s371 + $0xe0] sm:$0xff]
        %v467 = vld [vmem:[%s371 + $0xe8] sm:$0xff]
        %v468 = vld [vmem:[%s371 + $0xf0] sm:$0xff]
        %v469 = vld [vmem:[%s371 + $0xf8] sm:$0xff]
        %v470 = vld [vmem:[%s371 + $0x100] sm:$0xff]
        %v471 = vld [vmem:[%s371 + $0x108] sm:$0xff]
        %v472 = vld [vmem:[%s371 + $0x110] sm:$0xff]
        %v473 = vld [vmem:[%s371 + $0x118] sm:$0xff]
        %v474 = vld [vmem:[%s371 + $0x120] sm:$0xff]
        %v475 = vld [vmem:[%s371 + $0x128] sm:$0xff]
        %v476 = vld [vmem:[%s371 + $0x130] sm:$0xff]
        %v477 = vld [vmem:[%s371 + $0x138] sm:$0xff]
        %v478 = vld [vmem:[%s371 + $0x140] sm:$0xff]
        %v479 = vld [vmem:[%s371 + $0x148] sm:$0xff]
        %v480 = vld [vmem:[%s371 + $0x150] sm:$0xff]
        %v481 = vld [vmem:[%s371 + $0x158] sm:$0xff]
        %v482 = vld [vmem:[%s371 + $0x160] sm:$0xff]
        %v483 = vld [vmem:[%s371 + $0x168] sm:$0xff]
        %v484 = vld [vmem:[%s371 + $0x170] sm:$0xff]
        %v485 = vld [vmem:[%s371 + $0x178] sm:$0xff]
        %v486 = vld [vmem:[%s371 + $0x180] sm:$0xff]
        %v487 = vld [vmem:[%s371 + $0x188] sm:$0xff]
        %v488 = vld [vmem:[%s371 + $0x190] sm:$0xff]
        %v489 = vld [vmem:[%s371 + $0x198] sm:$0xff]
        %v490 = vld [vmem:[%s371 + $0x1a0] sm:$0xff]
        %v491 = vld [vmem:[%s371 + $0x1a8] sm:$0xff]
        %v492 = vld [vmem:[%s371 + $0x1b0] sm:$0xff]
        %v493 = vld [vmem:[%s371 + $0x1b8] sm:$0xff]
        %v494 = vld [vmem:[%s371 + $0x1c0] sm:$0xff]
        %v495 = vld [vmem:[%s371 + $0x1c8] sm:$0xff]
        %v496 = vld [vmem:[%s371 + $0x1d0] sm:$0xff]
        %v497 = vld [vmem:[%s371 + $0x1d8] sm:$0xff]
        %v498 = vld [vmem:[%s371 + $0x1e0] sm:$0xff]
        %v499 = vld [vmem:[%s371 + $0x1e8] sm:$0xff]
        %v500 = vld [vmem:[%s371 + $0x1f0] sm:$0xff]
        %v501 = vld [vmem:[%s371 + $0x1f8] sm:$0xff]
        %v502 = vld [vmem:[%s380] sm:$0xf]
        %v504 = vlaneseq
        %v505 = vshrl.u32 %v504, 7
        %v506 = vsub.s32 0, %v505
        %v507 = vrot.slane %v502, %v506
        %v508 = vlaneseq
        %v509 = vshrl.u32 %v508, 7
        %v510 = vsub.s32 1, %v509
        %v511 = vrot.slane %v502, %v510
        %v512 = vlaneseq
        %v513 = vshrl.u32 %v512, 7
        %v514 = vsub.s32 2, %v513
        %v515 = vrot.slane %v502, %v514
        %v516 = vlaneseq
        %v517 = vshrl.u32 %v516, 7
        %v518 = vsub.s32 3, %v517
        %v519 = vrot.slane %v502, %v518
        %v525 = vunpack.c.l.b16 %v437
        %v526 = vunpack.c.h.b16 %v437
        %v527 = vpack.c.b16 %v525, %v525
        %v528 = vpack.c.b16 %v526, %v526
        %v595 = vunpack.c.l.b16 %v438
        %v596 = vunpack.c.h.b16 %v438
        %v597 = vunpack.c.l.b16 %v439
        %v598 = vunpack.c.h.b16 %v439
        %v599 = vunpack.c.l.b16 %v440
        %v600 = vunpack.c.h.b16 %v440
        %v601 = vunpack.c.l.b16 %v441
        %v602 = vunpack.c.h.b16 %v441
        %v603 = vunpack.c.l.b16 %v442
        %v604 = vunpack.c.h.b16 %v442
        %v605 = vunpack.c.l.b16 %v443
        %v606 = vunpack.c.h.b16 %v443
        %v607 = vunpack.c.l.b16 %v444
        %v608 = vunpack.c.h.b16 %v444
        %v609 = vunpack.c.l.b16 %v445
        %v610 = vunpack.c.h.b16 %v445
        %v611 = vunpack.c.l.b16 %v446
        %v612 = vunpack.c.h.b16 %v446
        %v613 = vunpack.c.l.b16 %v447
        %v614 = vunpack.c.h.b16 %v447
        %v615 = vunpack.c.l.b16 %v448
        %v616 = vunpack.c.h.b16 %v448
        %v617 = vunpack.c.l.b16 %v449
        %v618 = vunpack.c.h.b16 %v449
        %v619 = vunpack.c.l.b16 %v450
        %v620 = vunpack.c.h.b16 %v450
        %v621 = vunpack.c.l.b16 %v451
        %v622 = vunpack.c.h.b16 %v451
        %v623 = vunpack.c.l.b16 %v452
        %v624 = vunpack.c.h.b16 %v452
        %v625 = vunpack.c.l.b16 %v453
        %v626 = vunpack.c.h.b16 %v453
        %v627 = vunpack.c.l.b16 %v454
        %v628 = vunpack.c.h.b16 %v454
        %v629 = vunpack.c.l.b16 %v455
        %v630 = vunpack.c.h.b16 %v455
        %v631 = vunpack.c.l.b16 %v456
        %v632 = vunpack.c.h.b16 %v456
        %v633 = vunpack.c.l.b16 %v457
        %v634 = vunpack.c.h.b16 %v457
        %v635 = vunpack.c.l.b16 %v458
        %v636 = vunpack.c.h.b16 %v458
        %v637 = vunpack.c.l.b16 %v459
        %v638 = vunpack.c.h.b16 %v459
        %v639 = vunpack.c.l.b16 %v460
        %v640 = vunpack.c.h.b16 %v460
        %v641 = vunpack.c.l.b16 %v461
        %v642 = vunpack.c.h.b16 %v461
        %v643 = vunpack.c.l.b16 %v462
        %v644 = vunpack.c.h.b16 %v462
        %v645 = vunpack.c.l.b16 %v463
        %v646 = vunpack.c.h.b16 %v463
        %v647 = vunpack.c.l.b16 %v464
        %v648 = vunpack.c.h.b16 %v464
        %v649 = vunpack.c.l.b16 %v465
        %v650 = vunpack.c.h.b16 %v465
        %v651 = vunpack.c.l.b16 %v466
        %v652 = vunpack.c.h.b16 %v466
        %v653 = vunpack.c.l.b16 %v467
        %v654 = vunpack.c.h.b16 %v467
        %v655 = vunpack.c.l.b16 %v468
        %v656 = vunpack.c.h.b16 %v468
        %v657 = vunpack.c.l.b16 %v469
        %v658 = vunpack.c.h.b16 %v469
        %v659 = vunpack.c.l.b16 %v470
        %v660 = vunpack.c.h.b16 %v470
        %v661 = vunpack.c.l.b16 %v471
        %v662 = vunpack.c.h.b16 %v471
        %v663 = vunpack.c.l.b16 %v472
        %v664 = vunpack.c.h.b16 %v472
        %v665 = vunpack.c.l.b16 %v473
        %v666 = vunpack.c.h.b16 %v473
        %v667 = vunpack.c.l.b16 %v474
        %v668 = vunpack.c.h.b16 %v474
        %v669 = vunpack.c.l.b16 %v475
        %v670 = vunpack.c.h.b16 %v475
        %v671 = vunpack.c.l.b16 %v476
        %v672 = vunpack.c.h.b16 %v476
        %v673 = vunpack.c.l.b16 %v477
        %v674 = vunpack.c.h.b16 %v477
        %v675 = vunpack.c.l.b16 %v478
        %v676 = vunpack.c.h.b16 %v478
        %v677 = vunpack.c.l.b16 %v479
        %v678 = vunpack.c.h.b16 %v479
        %v679 = vunpack.c.l.b16 %v480
        %v680 = vunpack.c.h.b16 %v480
        %v681 = vunpack.c.l.b16 %v481
        %v682 = vunpack.c.h.b16 %v481
        %v683 = vunpack.c.l.b16 %v482
        %v684 = vunpack.c.h.b16 %v482
        %v685 = vunpack.c.l.b16 %v483
        %v686 = vunpack.c.h.b16 %v483
        %v687 = vunpack.c.l.b16 %v484
        %v688 = vunpack.c.h.b16 %v484
        %v689 = vunpack.c.l.b16 %v485
        %v690 = vunpack.c.h.b16 %v485
        %v691 = vunpack.c.l.b16 %v486
        %v692 = vunpack.c.h.b16 %v486
        %v693 = vunpack.c.l.b16 %v487
        %v694 = vunpack.c.h.b16 %v487
        %v695 = vunpack.c.l.b16 %v488
        %v696 = vunpack.c.h.b16 %v488
        %v697 = vunpack.c.l.b16 %v489
        %v698 = vunpack.c.h.b16 %v489
        %v699 = vunpack.c.l.b16 %v490
        %v700 = vunpack.c.h.b16 %v490
        %v701 = vunpack.c.l.b16 %v491
        %v702 = vunpack.c.h.b16 %v491
        %v703 = vunpack.c.l.b16 %v492
        %v704 = vunpack.c.h.b16 %v492
        %v705 = vunpack.c.l.b16 %v493
        %v706 = vunpack.c.h.b16 %v493
        %v707 = vunpack.c.l.b16 %v494
        %v708 = vunpack.c.h.b16 %v494
        %v709 = vunpack.c.l.b16 %v495
        %v710 = vunpack.c.h.b16 %v495
        %v711 = vunpack.c.l.b16 %v496
        %v712 = vunpack.c.h.b16 %v496
        %v713 = vunpack.c.l.b16 %v497
        %v714 = vunpack.c.h.b16 %v497
        %v715 = vunpack.c.l.b16 %v498
        %v716 = vunpack.c.h.b16 %v498
        %v717 = vunpack.c.l.b16 %v499
        %v718 = vunpack.c.h.b16 %v499
        %v719 = vunpack.c.l.b16 %v500
        %v720 = vunpack.c.h.b16 %v500
        %v721 = vunpack.c.l.b16 %v501
        %v722 = vunpack.c.h.b16 %v501
        %v723 = vpack.c.b16 %v599, %v595
        %v724 = vpack.c.b16 %v600, %v596
        %v725 = vpack.c.b16 %v601, %v597
        %v726 = vpack.c.b16 %v602, %v598
        %v727 = vpack.c.b16 %v607, %v603
        %v728 = vpack.c.b16 %v608, %v604
        %v729 = vpack.c.b16 %v609, %v605
        %v730 = vpack.c.b16 %v610, %v606
        %v731 = vpack.c.b16 %v615, %v611
        %v732 = vpack.c.b16 %v616, %v612
        %v733 = vpack.c.b16 %v617, %v613
        %v734 = vpack.c.b16 %v618, %v614
        %v735 = vpack.c.b16 %v623, %v619
        %v736 = vpack.c.b16 %v624, %v620
        %v737 = vpack.c.b16 %v625, %v621
        %v738 = vpack.c.b16 %v626, %v622
        %v739 = vpack.c.b16 %v631, %v627
        %v740 = vpack.c.b16 %v632, %v628
        %v741 = vpack.c.b16 %v633, %v629
        %v742 = vpack.c.b16 %v634, %v630
        %v743 = vpack.c.b16 %v639, %v635
        %v744 = vpack.c.b16 %v640, %v636
        %v745 = vpack.c.b16 %v641, %v637
        %v746 = vpack.c.b16 %v642, %v638
        %v747 = vpack.c.b16 %v647, %v643
        %v748 = vpack.c.b16 %v648, %v644
        %v749 = vpack.c.b16 %v649, %v645
        %v750 = vpack.c.b16 %v650, %v646
        %v751 = vpack.c.b16 %v655, %v651
        %v752 = vpack.c.b16 %v656, %v652
        %v753 = vpack.c.b16 %v657, %v653
        %v754 = vpack.c.b16 %v658, %v654
        %v755 = vpack.c.b16 %v663, %v659
        %v756 = vpack.c.b16 %v664, %v660
        %v757 = vpack.c.b16 %v665, %v661
        %v758 = vpack.c.b16 %v666, %v662
        %v759 = vpack.c.b16 %v671, %v667
        %v760 = vpack.c.b16 %v672, %v668
        %v761 = vpack.c.b16 %v673, %v669
        %v762 = vpack.c.b16 %v674, %v670
        %v763 = vpack.c.b16 %v679, %v675
        %v764 = vpack.c.b16 %v680, %v676
        %v765 = vpack.c.b16 %v681, %v677
        %v766 = vpack.c.b16 %v682, %v678
        %v767 = vpack.c.b16 %v687, %v683
        %v768 = vpack.c.b16 %v688, %v684
        %v769 = vpack.c.b16 %v689, %v685
        %v770 = vpack.c.b16 %v690, %v686
        %v771 = vpack.c.b16 %v695, %v691
        %v772 = vpack.c.b16 %v696, %v692
        %v773 = vpack.c.b16 %v697, %v693
        %v774 = vpack.c.b16 %v698, %v694
        %v775 = vpack.c.b16 %v703, %v699
        %v776 = vpack.c.b16 %v704, %v700
        %v777 = vpack.c.b16 %v705, %v701
        %v778 = vpack.c.b16 %v706, %v702
        %v779 = vpack.c.b16 %v711, %v707
        %v780 = vpack.c.b16 %v712, %v708
        %v781 = vpack.c.b16 %v713, %v709
        %v782 = vpack.c.b16 %v714, %v710
        %v783 = vpack.c.b16 %v719, %v715
        %v784 = vpack.c.b16 %v720, %v716
        %v785 = vpack.c.b16 %v721, %v717
        %v786 = vpack.c.b16 %v722, %v718
        %851 = vmatprep.subr.bf16.mxu0 %v752
        %852 = vmatpush1.bf16.msra.mxu0 %v751
        %853 = vmatprep.subr.bf16.mxu0 %v748
        %854 = vmatpush1.bf16.msra.mxu0 %v747
        %855 = vmatprep.subr.bf16.mxu0 %v744
        %856 = vmatpush1.bf16.msra.mxu0 %v743
        %857 = vmatprep.subr.bf16.mxu0 %v740
        %858 = vmatpush1.bf16.msra.mxu0 %v739
        %859 = vmatprep.subr.bf16.mxu0 %v736
        %860 = vmatpush1.bf16.msra.mxu0 %v735
        %861 = vmatprep.subr.bf16.mxu0 %v732
        %862 = vmatpush1.bf16.msra.mxu0 %v731
        %863 = vmatprep.subr.bf16.mxu0 %v728
        %864 = vmatpush1.bf16.msra.mxu0 %v727
        %865 = vmatprep.subr.bf16.mxu0 %v724
        %866 = vmatpush1.bf16.msra.mxu0 %v723
        %867 = vmatprep.subr.bf16.mxu0 %v784
        %868 = vmatpush2.bf16.msra.mxu0 %v783
        %869 = vmatprep.subr.bf16.mxu0 %v780
        %870 = vmatpush2.bf16.msra.mxu0 %v779
        %871 = vmatprep.subr.bf16.mxu0 %v776
        %872 = vmatpush2.bf16.msra.mxu0 %v775
        %873 = vmatprep.subr.bf16.mxu0 %v772
        %874 = vmatpush2.bf16.msra.mxu0 %v771
        %875 = vmatprep.subr.bf16.mxu0 %v768
        %876 = vmatpush2.bf16.msra.mxu0 %v767
        %877 = vmatprep.subr.bf16.mxu0 %v764
        %878 = vmatpush2.bf16.msra.mxu0 %v763
        %879 = vmatprep.subr.bf16.mxu0 %v760
        %880 = vmatpush2.bf16.msra.mxu0 %v759
        %881 = vmatprep.subr.bf16.mxu0 %v756
        %882 = vmatpush2.bf16.msra.mxu0 %v755
        %883 = vmatprep.mubr.bf16.mxu0 %v528
        %884 = vmatmul.mubr.bf16.gmra.mxu0 %v527
        %v885 = vpop.f32.mrf.mxu0
        %v886 = vadd.f32 %v507, %v885
        %v887 = vpop.f32.mrf.mxu0
        %v888 = vadd.f32 %v511, %v887
        %v889 = vpop.f32.mrf.mxu0
        %v890 = vpop.f32.mrf.mxu0
        %891 = vdwg.mxu0
        %892 = vmatprep.subr.bf16.mxu0 %v754
        %893 = vmatpush1.bf16.msra.mxu0 %v753
        %894 = vmatprep.subr.bf16.mxu0 %v750
        %895 = vmatpush1.bf16.msra.mxu0 %v749
        %896 = vmatprep.subr.bf16.mxu0 %v746
        %897 = vmatpush1.bf16.msra.mxu0 %v745
        %898 = vmatprep.subr.bf16.mxu0 %v742
        %899 = vmatpush1.bf16.msra.mxu0 %v741
        %900 = vmatprep.subr.bf16.mxu0 %v738
        %901 = vmatpush1.bf16.msra.mxu0 %v737
        %902 = vmatprep.subr.bf16.mxu0 %v734
        %903 = vmatpush1.bf16.msra.mxu0 %v733
        %904 = vmatprep.subr.bf16.mxu0 %v730
        %905 = vmatpush1.bf16.msra.mxu0 %v729
        %906 = vmatprep.subr.bf16.mxu0 %v726
        %907 = vmatpush1.bf16.msra.mxu0 %v725
        %908 = vmatprep.subr.bf16.mxu0 %v786
        %909 = vmatpush2.bf16.msra.mxu0 %v785
        %910 = vmatprep.subr.bf16.mxu0 %v782
        %911 = vmatpush2.bf16.msra.mxu0 %v781
        %912 = vmatprep.subr.bf16.mxu0 %v778
        %913 = vmatpush2.bf16.msra.mxu0 %v777
        %914 = vmatprep.subr.bf16.mxu0 %v774
        %915 = vmatpush2.bf16.msra.mxu0 %v773
        %916 = vmatprep.subr.bf16.mxu0 %v770
        %917 = vmatpush2.bf16.msra.mxu0 %v769
        %918 = vmatprep.subr.bf16.mxu0 %v766
        %919 = vmatpush2.bf16.msra.mxu0 %v765
        %920 = vmatprep.subr.bf16.mxu0 %v762
        %921 = vmatpush2.bf16.msra.mxu0 %v761
        %922 = vmatprep.subr.bf16.mxu0 %v758
        %923 = vmatpush2.bf16.msra.mxu0 %v757
        %924 = vmatprep.mubr.bf16.mxu0 %v528
        %925 = vmatmul.mubr.bf16.gmra.mxu0 %v527
        %v926 = vpop.f32.mrf.mxu0
        %v927 = vadd.f32 %v515, %v926
        %v928 = vpop.f32.mrf.mxu0
        %v929 = vadd.f32 %v519, %v928
        %v930 = vpop.f32.mrf.mxu0
        %v931 = vpop.f32.mrf.mxu0
        %932 = vdwg.mxu0
        %v933 = vmul.f32 %v886, 0.5
        %v934 = vtanh.pop %v933
        %v935 = vmul.f32 %v934, 0.5
        %v936 = vadd.f32 %v935, 0.5
        %v937 = vmul.f32 %v888, 0.5
        %v938 = vtanh.pop %v937
        %v939 = vmul.f32 %v938, 0.5
        %v940 = vadd.f32 %v939, 0.5
        %v941 = vtanh.pop %v927
        %v942 = vmul.f32 %v929, 0.5
        %v943 = vtanh.pop %v942
        %v944 = vmul.f32 %v943, 0.5
        %v945 = vadd.f32 %v944, 0.5
        %v946 = vld [vmem:[%s362] sm:$0xff]
        %v947 = vmul.f32 %v940, %v946
        %v948 = vmul.f32 %v936, %v941
        %v949 = vadd.f32 %v947, %v948
        %v950 = vtanh.pop %v949
        %v951 = vmul.f32 %v945, %v950
        %952 = vst [vmem:[%s421] sm:$0xff] %v951
        %953 = vst [vmem:[%s428] sm:$0xff] %v949
        %v954 = vpack.c.bf16 %v951, %v951
        %955 = vst [vmem:[#allocation2] sm:$0xf] %v954
        %s956 = sand.u32 %s187, 1
        %s957 = scalar_lea.sflag [#allocation5], %s956
        %s958 = sand.u32 %s187, 1
        %s959 = smul.addr %s958, 8
        %s960 = scalar_lea.vmem [#allocation12], %s959
        %s961 = sand.u32 %s215, 1
        %s962 = scalar_lea.sflag [#allocation14], %s961
        %s963 = sand.u32 %s215, 1
        %s964 = smul.addr %s963, 8
        %s965 = scalar_lea.vmem [#allocation13], %s964
        // Predicated region
        $region65: #{tpu_custom_call.1} parent=39 // pred_check
          %p966 = pneg %p197
        $region66: #{tpu_custom_call.1} parent=39 // pred_check_branch
          %968 = sbr.rel (%p966) target = $region68
        $region67: #{tpu_custom_call.1} parent=39 // pred_region
          %s970 = ssub.s32 128, 128
          %971 = vsyncadd %s957, %s970
          %s972 = sadd.s32 %s35, %s36
          %s973 = smul.addr %s972, 128
          %s974 = scalar_lea.hbm %s5, %s973
          %s976 = sshll.u32 %s960, 4
          %s977 = int_to_ptr.vmem [resolvable:$true] %s976
          %979 = dma.vmem_to_hbm [thread:$0]  %s977, 128, %s974, %s957
        $region68: #{tpu_custom_call.1} parent=39 // pred_fallthru
          _
        // Predicated region
        $region69: #{tpu_custom_call.1} parent=39 // pred_check
          %p980 = pneg %p225
        $region70: #{tpu_custom_call.1} parent=39 // pred_check_branch
          %982 = sbr.rel (%p980) target = $region72
        $region71: #{tpu_custom_call.1} parent=39 // pred_region
          %s984 = ssub.s32 128, 128
          %985 = vsyncadd %s962, %s984
          %s986 = sadd.s32 %s35, %s36
          %s987 = smul.addr %s986, 128
          %s988 = scalar_lea.hbm %s6, %s987
          %s990 = sshll.u32 %s965, 4
          %s991 = int_to_ptr.vmem [resolvable:$true] %s990
          %993 = dma.vmem_to_hbm [thread:$0]  %s991, 128, %s988, %s962
        $region72: #{tpu_custom_call.1} parent=39 // pred_fallthru
          _
      $region40: #{tpu_custom_call.1} parent=5 // pred_fallthru
        _
      %p994 = scmp.le.s32.totalorder 2, %s26
      // Predicated region
      $region73: #{tpu_custom_call.1} parent=5 // pred_check
        %p995 = pneg %p994
      $region74: #{tpu_custom_call.1} parent=5 // pred_check_branch
        %997 = sbr.rel (%p995) target = $region76
      $region75: #{tpu_custom_call.1} parent=5 // pred_region
        %s998 = ssub.s32 %s26, 2
        // Predicated region
        $region77: #{tpu_custom_call.1} parent=75 // pred_check
          %p999 = pneg %p203
        $region78: #{tpu_custom_call.1} parent=75 // pred_check_branch
          %1001 = sbr.rel (%p999) target = $region80
        $region79: #{tpu_custom_call.1} parent=75 // pred_region
          %s1002 = sand.u32 %s188, 1
          %s1003 = scalar_lea.sflag [#allocation5], %s1002
          %s1004 = sand.u32 %s188, 1
          %s1005 = smul.addr %s1004, 8
          %s1006 = scalar_lea.vmem [#allocation12], %s1005
          %1007 = dma.done %s1003, 128
        $region80: #{tpu_custom_call.1} parent=75 // pred_fallthru
          _
        // Predicated region
        $region81: #{tpu_custom_call.1} parent=75 // pred_check
          %p1008 = pneg %p231
        $region82: #{tpu_custom_call.1} parent=75 // pred_check_branch
          %1010 = sbr.rel (%p1008) target = $region84
        $region83: #{tpu_custom_call.1} parent=75 // pred_region
          %s1011 = sand.u32 %s216, 1
          %s1012 = scalar_lea.sflag [#allocation14], %s1011
          %s1013 = sand.u32 %s216, 1
          %s1014 = smul.addr %s1013, 8
          %s1015 = scalar_lea.vmem [#allocation13], %s1014
          %1016 = dma.done %s1012, 128
        $region84: #{tpu_custom_call.1} parent=75 // pred_fallthru
          _
      $region76: #{tpu_custom_call.1} parent=5 // pred_fallthru
        _
    $region6: #{tpu_custom_call.1} parent=1 // loop_footer
      %s30 = sadd.s32 1, %s26
    $region7: #{tpu_custom_call.1} parent=1 // loop_footer_branch
      %25 = sbr.rel target = $region3
    $region8: #{tpu_custom_call.1} parent=1 // loop_exit
      _
    %1017 = vsyncpa [#allocation4], 1
    %s1018 = scalar_lea.sflag [#allocation4], 1
    %1019 = vsyncpa %s1018, 1
    %1020 = vsyncpa [#allocation7], 1
    %s1021 = scalar_lea.sflag [#allocation7], 1
    %1022 = vsyncpa %s1021, 1
    %1023 = vsyncpa [#allocation10], 1
    %s1024 = scalar_lea.sflag [#allocation10], 1
    %1025 = vsyncpa %s1024, 1
    %1026 = vsyncpa [#allocation5], 1
    %s1027 = scalar_lea.sflag [#allocation5], 1
    %1028 = vsyncpa %s1027, 1
    %1029 = vsyncpa [#allocation14], 1
    %s1030 = scalar_lea.sflag [#allocation14], 1
    %1031 = vsyncpa %s1030, 1

</llo_original>
